<compile_context>
chip_gen: v7x
topology: tpu7x:2x2x1
jax: 0.10.0
libtpu: 0.0.40
codegen_flags: <defaults>
</compile_context>

<pallas_src>
import functools
import math

import jax
import jax.numpy as jnp
from jax.experimental import pallas as pl
from jax.experimental.pallas import tpu as pltpu

LN_EPS = 1e-5
MAX_ROW_TILE = 512  # candidate-encoder rows per grid step


# ----------------------------------------------------------------------------
# In-kernel helpers
# ----------------------------------------------------------------------------
def _layer_norm(h, g, b, eps=LN_EPS):
    mu = jnp.mean(h, axis=-1, keepdims=True)
    var = jnp.mean(jnp.square(h - mu), axis=-1, keepdims=True)
    return (h - mu) * jax.lax.rsqrt(var + eps) * g + b


def _round_up(x, m):
    return (x + m - 1) // m * m


# ----------------------------------------------------------------------------
# Kernel 1: candidate encoder (self.linear -> blocks0[0] -> mixer LN -> self.K)
# Hoisted out of the query path; its output (cand_k) is cacheable.
# ----------------------------------------------------------------------------
def cand_encoder_kernel(feat_ref, w_lin_ref, b_lin_ref, w1_ref, b1_ref,
                        w2_ref, b2_ref, g_ref, be_ref, wk_ref, bk_ref,
                        k_out_ref):
    f = feat_ref[...]
    h = jnp.dot(f, w_lin_ref[...], preferred_element_type=jnp.float32) + b_lin_ref[...]
    # blocks0[0]: Linear -> ReLU -> (Dropout=id) -> Linear -> (Dropout=id), residual
    z = jnp.maximum(
        jnp.dot(h, w1_ref[...], preferred_element_type=jnp.float32) + b1_ref[...], 0.0)
    h = h + jnp.dot(z, w2_ref[...], preferred_element_type=jnp.float32) + b2_ref[...]
    hn = _layer_norm(h, g_ref[...], be_ref[...])
    k_out_ref[...] = jnp.dot(hn, wk_ref[...], preferred_element_type=jnp.float32) + bk_ref[...]


def _const_spec(arr):
    nd = arr.ndim
    return pl.BlockSpec(arr.shape, lambda i, _nd=nd: (0,) * _nd)


def encode_candidates(cand_feat, p, max_row_tile=MAX_ROW_TILE):
    n, d_in = cand_feat.shape
    d_main = p["w_k"].shape[1]
    tile = min(max_row_tile, _round_up(n, 8))
    n_pad = _round_up(n, tile)
    if n_pad != n:
        cand_feat = jnp.pad(cand_feat, ((0, n_pad - n), (0, 0)))
    weights = (p["w_lin"], p["b_lin"], p["w1"], p["b1"], p["w2"], p["b2"],
               p["ln_mix_g"], p["ln_mix_b"], p["w_k"], p["b_k"])
    in_specs = [pl.BlockSpec((tile, d_in), lambda i: (i, 0))]
    in_specs += [_const_spec(w) for w in weights]
    cand_k = pl.pallas_call(
        cand_encoder_kernel,
        grid=(n_pad // tile,),
        in_specs=in_specs,
        out_specs=pl.BlockSpec((tile, d_main), lambda i: (i, 0)),
        out_shape=jax.ShapeDtypeStruct((n_pad, d_main), jnp.float32),
        compiler_params=pltpu.CompilerParams(dimension_semantics=("parallel",)),
    )(cand_feat, *weights)
    return cand_k[:n]


# ----------------------------------------------------------------------------
# Kernel 2: fully fused per-query path
#   query encoder -> L2 distances -> in-kernel top-C -> retrieval mixing ->
#   predictor block -> head
# ----------------------------------------------------------------------------
def fused_query_kernel(
        feat_ref, ck_ref, cy_ref,
        w_lin_ref, b_lin_ref, w1_ref, b1_ref, w2_ref, b2_ref,
        g_mix_ref, b_mix_ref, wk_ref, bk_ref,
        wlab_ref, blab_ref, wt1_ref, bt1_ref, wt2_ref,
        lnp_g_ref, lnp_b_ref, wp1_ref, bp1_ref, wp2_ref, bp2_ref,
        lnh_g_ref, lnh_b_ref, wh_ref, bh_ref,
        out_ref, *, context_size):
    # ---- query encoder: self.linear -> blocks0[0] -> mixer LayerNorm -> self.K
    f = feat_ref[...]                                                      # [B, d_in]
    h = jnp.dot(f, w_lin_ref[...], preferred_element_type=jnp.float32) + b_lin_ref[...]
    z = jnp.maximum(
        jnp.dot(h, w1_ref[...], preferred_element_type=jnp.float32) + b1_ref[...], 0.0)
    x = h + jnp.dot(z, w2_ref[...], preferred_element_type=jnp.float32) + b2_ref[...]
    k = (jnp.dot(_layer_norm(x, g_mix_ref[...], b_mix_ref[...]), wk_ref[...],
                 preferred_element_type=jnp.float32) + bk_ref[...])        # [B, D]

    ck = ck_ref[...]                                                       # [N, D]
    cy = cy_ref[...]                                                       # [1, N]
    n_cand = ck.shape[0]
    b = k.shape[0]

    # ---- negative squared L2 similarity to ALL candidates (faiss IndexFlatL2 metric)
    kc = jax.lax.dot_general(k, ck, (((1,), (1,)), ((), ())),
                             preferred_element_type=jnp.float32)           # [B, N] on MXU
    sim = (2.0 * kc
           - jnp.sum(k * k, axis=-1, keepdims=True)
           - jnp.sum(ck * ck, axis=-1)[None, :])                           # [B, N]

    # ---- in-kernel top-C selection (iterative max; first-index tie-break, same
    # candidate set as lax.top_k / faiss). The softmax-weighted context sum is
    # permutation invariant, so it is accumulated on-the-fly: no sort needed.
    lane = jax.lax.broadcasted_iota(jnp.float32, sim.shape, 1)             # [B, N]
    wlab = wlab_ref[...]                                                   # [1, D]
    blab = blab_ref[...]                                                   # [1, D]
    work = sim
    m0 = None
    num = jnp.zeros_like(x)                                                # [B, D]
    den = jnp.zeros((b, 1), jnp.float32)
    for _ in range(context_size):                                          # small static unroll
        m = jnp.max(work, axis=-1, keepdims=True)                          # [B, 1]
        pick = jnp.min(jnp.where(work >= m, lane, float(n_cand)),
                       axis=-1, keepdims=True)                             # [B, 1] argmax
        oh = (lane == pick).astype(jnp.float32)                            # [B, N] one-hot
        work = jnp.where(oh > 0.0, -jnp.inf, work)
        if m0 is None:
            m0 = m                                                         # overall max (softmax shift)
        w_ctx = jnp.exp(m - m0)                                            # unnormalized softmax weight
        # gather of the selected candidate via one-hot matmul (stays in VMEM)
        ctx_k = jnp.dot(oh, ck, preferred_element_type=jnp.float32)        # [B, D]
        ctx_y = jnp.sum(oh * cy, axis=-1, keepdims=True)                   # [B, 1]
        # label encoder Linear(1, D) + T(k - context_k): Linear -> ReLU -> Linear(no bias)
        y_emb = ctx_y * wlab + blab                                        # [B, D]
        t = jnp.maximum(
            jnp.dot(k - ctx_k, wt1_ref[...], preferred_element_type=jnp.float32)
            + bt1_ref[...], 0.0)
        t = jnp.dot(t, wt2_ref[...], preferred_element_type=jnp.float32)
        num = num + w_ctx * (y_emb + t)
        den = den + w_ctx

    h = x + num / den                                                      # x + probs @ values

    # blocks1[0]: prenorm residual MLP block
    hn = _layer_norm(h, lnp_g_ref[...], lnp_b_ref[...])
    z = jnp.maximum(
        jnp.dot(hn, wp1_ref[...], preferred_element_type=jnp.float32) + bp1_ref[...], 0.0)
    h = h + jnp.dot(z, wp2_ref[...], preferred_element_type=jnp.float32) + bp2_ref[...]

    # head: LayerNorm -> ReLU -> Linear(D, 1) as a VPU multiply + lane reduce
    hn = jnp.maximum(_layer_norm(h, lnh_g_ref[...], lnh_b_ref[...]), 0.0)
    out_ref[...] = jnp.sum(hn * wh_ref[...], axis=-1, keepdims=True) + bh_ref[...]


def retrieve_and_predict(p, x_feat, cand_k, cand_y, context_size):
    b = x_feat.shape[0]
    inputs = (x_feat, cand_k, cand_y.reshape(1, -1),
              p["w_lin"], p["b_lin"], p["w1"], p["b1"], p["w2"], p["b2"],
              p["ln_mix_g"], p["ln_mix_b"], p["w_k"], p["b_k"],
              p["w_lab"], p["b_lab"], p["w_t1"], p["b_t1"], p["w_t2"],
              p["ln_p_g"], p["ln_p_b"], p["w_p1"], p["b_p1"], p["w_p2"], p["b_p2"],
              p["ln_h_g"], p["ln_h_b"], p["w_h"], p["b_h"])
    vmem = pl.BlockSpec(memory_space=pltpu.MemorySpace.VMEM)
    return pl.pallas_call(
        functools.partial(fused_query_kernel, context_size=context_size),
        out_shape=jax.ShapeDtypeStruct((b, 1), jnp.float32),
        in_specs=[vmem] * len(inputs),
        out_specs=vmem,
    )(*inputs)


# ----------------------------------------------------------------------------
# Full forward (eval, is_train=False): 2 pallas_calls, no XLA glue in the
# query path (feature concat stays in the wrapper, as in the module).
# ----------------------------------------------------------------------------
def tabr_forward(p, x_feat, cand_feat, cand_y, context_size):
    assert context_size <= cand_feat.shape[0]
    cand_k = encode_candidates(cand_feat, p)                 # hoisted / cacheable
    return retrieve_and_predict(p, x_feat, cand_k, cand_y, context_size)


# ----------------------------------------------------------------------------
# Deterministic parameter init (PyTorch nn.Linear-style uniform, same shapes)
# ----------------------------------------------------------------------------
def init_params(key, d_in, d_main, d_block):
    keys = iter(jax.random.split(key, 32))

    def lin(fan_in, fan_out, bias=True):
        bound = 1.0 / math.sqrt(fan_in)
        w = jax.random.uniform(next(keys), (fan_in, fan_out), jnp.float32, -bound, bound)
        b = (jax.random.uniform(next(keys), (1, fan_out), jnp.float32, -bound, bound)
             if bias else None)
        return w, b

    p = {}
    p["w_lin"], p["b_lin"] = lin(d_in, d_main)            # self.linear
    p["w1"], p["b1"] = lin(d_main, d_block)               # blocks0[0] Linear
    p["w2"], p["b2"] = lin(d_block, d_main)               # blocks0[0] Linear
    p["ln_mix_g"] = jnp.ones((1, d_main), jnp.float32)    # self.normalization
    p["ln_mix_b"] = jnp.zeros((1, d_main), jnp.float32)
    p["w_k"], p["b_k"] = lin(d_main, d_main)              # self.K
    bound = 1.0 / math.sqrt(2.0)                          # label_encoder reset_parameters
    p["w_lab"] = jax.random.uniform(next(keys), (1, d_main), jnp.float32, -bound, bound)
    p["b_lab"] = jax.random.uniform(next(keys), (1, d_main), jnp.float32, -bound, bound)
    p["w_t1"], p["b_t1"] = lin(d_main, d_block)           # self.T[0]
    p["w_t2"], _ = lin(d_block, d_main, bias=False)       # self.T[-1] (no bias)
    p["ln_p_g"] = jnp.ones((1, d_main), jnp.float32)      # blocks1[0] LayerNorm
    p["ln_p_b"] = jnp.zeros((1, d_main), jnp.float32)
    p["w_p1"], p["b_p1"] = lin(d_main, d_block)
    p["w_p2"], p["b_p2"] = lin(d_block, d_main)
    p["ln_h_g"] = jnp.ones((1, d_main), jnp.float32)      # head LayerNorm
    p["ln_h_b"] = jnp.zeros((1, d_main), jnp.float32)
    bound = 1.0 / math.sqrt(d_main)                       # head Linear (d_out=1), row layout
    p["w_h"] = jax.random.uniform(next(keys), (1, d_main), jnp.float32, -bound, bound)
    p["b_h"] = jax.random.uniform(next(keys), (1, 1), jnp.float32, -bound, bound)
    return p


# ----------------------------------------------------------------------------
# Pure-JAX reference (same math as the PyTorch module, eval mode), uses
# lax.top_k + gather so it also cross-checks the in-kernel top-C selection.
# ----------------------------------------------------------------------------
def reference_forward(p, x_feat, cand_feat, cand_y, context_size):
    def ln(h, g, b):
        mu = h.mean(-1, keepdims=True)
        var = jnp.mean((h - mu) ** 2, -1, keepdims=True)
        return (h - mu) / jnp.sqrt(var + LN_EPS) * g + b

    def enc(f):
        h = f @ p["w_lin"] + p["b_lin"]
        z = jax.nn.relu(h @ p["w1"] + p["b1"])
        h = h + z @ p["w2"] + p["b2"]
        kk = ln(h, p["ln_mix_g"], p["ln_mix_b"]) @ p["w_k"] + p["b_k"]
        return h, kk

    _, cand_k = enc(cand_feat)
    x, k = enc(x_feat)
    d = (jnp.sum(k ** 2, -1, keepdims=True) - 2.0 * (k @ cand_k.T)
         + jnp.sum(cand_k ** 2, -1)[None, :])
    _, idx = jax.lax.top_k(-d, context_size)
    ck, cy = cand_k[idx], cand_y[idx]
    sim = (-jnp.sum(k ** 2, -1, keepdims=True)
           + 2.0 * jnp.einsum("bd,bcd->bc", k, ck)
           - jnp.sum(ck ** 2, -1))
    probs = jax.nn.softmax(sim, axis=-1)
    y_emb = cy[..., None] * p["w_lab"][0] + p["b_lab"][0]
    diff = k[:, None, :] - ck
    t = jax.nn.relu(diff @ p["w_t1"] + p["b_t1"][0]) @ p["w_t2"]
    values = y_emb + t
    ctx = jnp.einsum("bc,bcd->bd", probs, values)
    h = x + ctx
    z = jax.nn.relu(ln(h, p["ln_p_g"], p["ln_p_b"]) @ p["w_p1"] + p["b_p1"])
    h = h + z @ p["w_p2"] + p["b_p2"]
    h = jax.nn.relu(ln(h, p["ln_h_g"], p["ln_h_b"]))
    return jnp.sum(h * p["w_h"], -1, keepdims=True) + p["b_h"]


# ----------------------------------------------------------------------------
if __name__ == "__main__":
    # model config
    N_NUM, N_BIN = 8, 4
    D_IN = N_NUM + N_BIN
    D_MAIN, D_BLOCK = 32, 64
    B, N_CAND, CONTEXT = 8, 32, 8

    key = jax.random.PRNGKey(0)
    kp, kqn, kqb, kcn, kcb, ky = jax.random.split(key, 6)
    params = init_params(kp, D_IN, D_MAIN, D_BLOCK)

    x_num = jax.random.normal(kqn, (B, N_NUM), jnp.float32)
    x_bin = (jax.random.uniform(kqb, (B, N_BIN)) > 0.5).astype(jnp.float32)
    c_num = jax.random.normal(kcn, (N_CAND, N_NUM), jnp.float32)
    c_bin = (jax.random.uniform(kcb, (N_CAND, N_BIN)) > 0.5).astype(jnp.float32)
    cand_y = jax.random.normal(ky, (N_CAND,), jnp.float32)  # regression labels

    # x_ = {'num': x_num, 'bin': x_bin}; feature concat is glue (as in _encode).
    x_feat = jnp.concatenate([x_num, x_bin], axis=1)
    cand_feat = jnp.concatenate([c_num, c_bin], axis=1)

    out = tabr_forward(params, x_feat, cand_feat, cand_y, CONTEXT)
    out = jax.block_until_ready(out)

    ref = reference_forward(params, x_feat, cand_feat, cand_y, CONTEXT)
    err = float(jnp.max(jnp.abs(out - ref)))

    assert out.shape == (B, 1), out.shape
    assert bool(jnp.all(jnp.isfinite(out)))
    assert err < 1e-2, f"max abs diff vs reference = {err}"
    print("KERNEL_OK")
</pallas_src>

<mosaic_0001>
module attributes {stable_mosaic.version = 11 : i64} {
  func.func @cand_encoder_kernel(%arg0: i32, %arg1: memref<32x12xf32, #tpu.memory_space<vmem>>, %arg2: memref<12x32xf32, #tpu.memory_space<vmem>>, %arg3: memref<1x32xf32, #tpu.memory_space<vmem>>, %arg4: memref<32x64xf32, #tpu.memory_space<vmem>>, %arg5: memref<1x64xf32, #tpu.memory_space<vmem>>, %arg6: memref<64x32xf32, #tpu.memory_space<vmem>>, %arg7: memref<1x32xf32, #tpu.memory_space<vmem>>, %arg8: memref<1x32xf32, #tpu.memory_space<vmem>>, %arg9: memref<1x32xf32, #tpu.memory_space<vmem>>, %arg10: memref<32x32xf32, #tpu.memory_space<vmem>>, %arg11: memref<1x32xf32, #tpu.memory_space<vmem>>, %arg12: memref<32x32xf32, #tpu.memory_space<vmem>>) attributes {dimension_semantics = [#tpu.dimension_semantics<parallel>], iteration_bounds = array<i64: 1>, scalar_prefetch = 0 : i64, scratch_operands = 0 : i64, tpu.core_type = #tpu.core_type<tc>, window_params = [{transform_indices = @transform_0, window_bounds = array<i64: 32, 12>}, {pipeline_mode = #tpu.pipeline_mode<synchronous>, transform_indices = @transform_1, window_bounds = array<i64: 12, 32>}, {pipeline_mode = #tpu.pipeline_mode<synchronous>, transform_indices = @transform_2, window_bounds = array<i64: 1, 32>}, {pipeline_mode = #tpu.pipeline_mode<synchronous>, transform_indices = @transform_3, window_bounds = array<i64: 32, 64>}, {pipeline_mode = #tpu.pipeline_mode<synchronous>, transform_indices = @transform_4, window_bounds = array<i64: 1, 64>}, {pipeline_mode = #tpu.pipeline_mode<synchronous>, transform_indices = @transform_5, window_bounds = array<i64: 64, 32>}, {pipeline_mode = #tpu.pipeline_mode<synchronous>, transform_indices = @transform_6, window_bounds = array<i64: 1, 32>}, {pipeline_mode = #tpu.pipeline_mode<synchronous>, transform_indices = @transform_7, window_bounds = array<i64: 1, 32>}, {pipeline_mode = #tpu.pipeline_mode<synchronous>, transform_indices = @transform_8, window_bounds = array<i64: 1, 32>}, {pipeline_mode = #tpu.pipeline_mode<synchronous>, transform_indices = @transform_9, window_bounds = array<i64: 32, 32>}, {pipeline_mode = #tpu.pipeline_mode<synchronous>, transform_indices = @transform_10, window_bounds = array<i64: 1, 32>}, {transform_indices = @transform_11, window_bounds = array<i64: 32, 32>}]} {
    %c0 = arith.constant 0 : index
    %c0_0 = arith.constant 0 : index
    %0 = vector.load %arg1[%c0, %c0_0] : memref<32x12xf32, #tpu.memory_space<vmem>>, vector<32x12xf32>
    %c0_1 = arith.constant 0 : index
    %c0_2 = arith.constant 0 : index
    %1 = vector.load %arg2[%c0_1, %c0_2] : memref<12x32xf32, #tpu.memory_space<vmem>>, vector<12x32xf32>
    %cst = arith.constant dense<0.000000e+00> : vector<32x32xf32>
    %2 = tpu.matmul %0, %1, %cst {dimension_numbers = #tpu.dot_dimension_numbers<[1], [0], [0], [1], [0, 0, 1, 1], [], []>} : vector<32x12xf32>, vector<12x32xf32>, vector<32x32xf32> -> vector<32x32xf32>
    %c0_3 = arith.constant 0 : index
    %c0_4 = arith.constant 0 : index
    %3 = vector.load %arg3[%c0_3, %c0_4] : memref<1x32xf32, #tpu.memory_space<vmem>>, vector<1x32xf32>
    %4 = vector.broadcast %3 : vector<1x32xf32> to vector<32x32xf32>
    %5 = arith.addf %2, %4 : vector<32x32xf32>
    %c0_5 = arith.constant 0 : index
    %c0_6 = arith.constant 0 : index
    %6 = vector.load %arg4[%c0_5, %c0_6] : memref<32x64xf32, #tpu.memory_space<vmem>>, vector<32x64xf32>
    %cst_7 = arith.constant dense<0.000000e+00> : vector<32x64xf32>
    %7 = tpu.matmul %5, %6, %cst_7 {dimension_numbers = #tpu.dot_dimension_numbers<[1], [0], [0], [1], [0, 0, 1, 1], [], []>} : vector<32x32xf32>, vector<32x64xf32>, vector<32x64xf32> -> vector<32x64xf32>
    %c0_8 = arith.constant 0 : index
    %c0_9 = arith.constant 0 : index
    %8 = vector.load %arg5[%c0_8, %c0_9] : memref<1x64xf32, #tpu.memory_space<vmem>>, vector<1x64xf32>
    %9 = vector.broadcast %8 : vector<1x64xf32> to vector<32x64xf32>
    %10 = arith.addf %7, %9 : vector<32x64xf32>
    %cst_10 = arith.constant 0.000000e+00 : f32
    %11 = vector.broadcast %cst_10 : f32 to vector<32x64xf32>
    %12 = arith.maximumf %10, %11 : vector<32x64xf32>
    %c0_11 = arith.constant 0 : index
    %c0_12 = arith.constant 0 : index
    %13 = vector.load %arg6[%c0_11, %c0_12] : memref<64x32xf32, #tpu.memory_space<vmem>>, vector<64x32xf32>
    %cst_13 = arith.constant dense<0.000000e+00> : vector<32x32xf32>
    %14 = tpu.matmul %12, %13, %cst_13 {dimension_numbers = #tpu.dot_dimension_numbers<[1], [0], [0], [1], [0, 0, 1, 1], [], []>} : vector<32x64xf32>, vector<64x32xf32>, vector<32x32xf32> -> vector<32x32xf32>
    %15 = arith.addf %5, %14 : vector<32x32xf32>
    %c0_14 = arith.constant 0 : index
    %c0_15 = arith.constant 0 : index
    %16 = vector.load %arg7[%c0_14, %c0_15] : memref<1x32xf32, #tpu.memory_space<vmem>>, vector<1x32xf32>
    %17 = vector.broadcast %16 : vector<1x32xf32> to vector<32x32xf32>
    %18 = arith.addf %15, %17 : vector<32x32xf32>
    %c0_16 = arith.constant 0 : index
    %c0_17 = arith.constant 0 : index
    %19 = vector.load %arg8[%c0_16, %c0_17] : memref<1x32xf32, #tpu.memory_space<vmem>>, vector<1x32xf32>
    %c0_18 = arith.constant 0 : index
    %c0_19 = arith.constant 0 : index
    %20 = vector.load %arg9[%c0_18, %c0_19] : memref<1x32xf32, #tpu.memory_space<vmem>>, vector<1x32xf32>
    %cst_20 = arith.constant dense<0.000000e+00> : vector<32xf32>
    %21 = vector.multi_reduction <add>, %18, %cst_20 [1] : vector<32x32xf32> to vector<32xf32>
    %22 = vector.shape_cast %21 : vector<32xf32> to vector<32x1xf32>
    %cst_21 = arith.constant 3.200000e+01 : f32
    %23 = vector.broadcast %cst_21 : f32 to vector<32x1xf32>
    %24 = arith.divf %22, %23 : vector<32x1xf32>
    %25 = vector.broadcast %24 : vector<32x1xf32> to vector<32x32xf32>
    %26 = arith.subf %18, %25 : vector<32x32xf32>
    %27 = arith.mulf %26, %26 : vector<32x32xf32>
    %cst_22 = arith.constant dense<0.000000e+00> : vector<32xf32>
    %28 = vector.multi_reduction <add>, %27, %cst_22 [1] : vector<32x32xf32> to vector<32xf32>
    %29 = vector.shape_cast %28 : vector<32xf32> to vector<32x1xf32>
    %cst_23 = arith.constant 3.200000e+01 : f32
    %30 = vector.broadcast %cst_23 : f32 to vector<32x1xf32>
    %31 = arith.divf %29, %30 : vector<32x1xf32>
    %32 = vector.broadcast %24 : vector<32x1xf32> to vector<32x32xf32>
    %33 = arith.subf %18, %32 : vector<32x32xf32>
    %cst_24 = arith.constant 9.99999974E-6 : f32
    %34 = vector.broadcast %cst_24 : f32 to vector<32x1xf32>
    %35 = arith.addf %31, %34 : vector<32x1xf32>
    %36 = math.rsqrt %35 : vector<32x1xf32>
    %37 = vector.broadcast %36 : vector<32x1xf32> to vector<32x32xf32>
    %38 = arith.mulf %33, %37 : vector<32x32xf32>
    %39 = vector.broadcast %19 : vector<1x32xf32> to vector<32x32xf32>
    %40 = arith.mulf %38, %39 : vector<32x32xf32>
    %41 = vector.broadcast %20 : vector<1x32xf32> to vector<32x32xf32>
    %42 = arith.addf %40, %41 : vector<32x32xf32>
    %c0_25 = arith.constant 0 : index
    %c0_26 = arith.constant 0 : index
    %43 = vector.load %arg10[%c0_25, %c0_26] : memref<32x32xf32, #tpu.memory_space<vmem>>, vector<32x32xf32>
    %cst_27 = arith.constant dense<0.000000e+00> : vector<32x32xf32>
    %44 = tpu.matmul %42, %43, %cst_27 {dimension_numbers = #tpu.dot_dimension_numbers<[1], [0], [0], [1], [0, 0, 1, 1], [], []>} : vector<32x32xf32>, vector<32x32xf32>, vector<32x32xf32> -> vector<32x32xf32>
    %c0_28 = arith.constant 0 : index
    %c0_29 = arith.constant 0 : index
    %45 = vector.load %arg11[%c0_28, %c0_29] : memref<1x32xf32, #tpu.memory_space<vmem>>, vector<1x32xf32>
    %46 = vector.broadcast %45 : vector<1x32xf32> to vector<32x32xf32>
    %47 = arith.addf %44, %46 : vector<32x32xf32>
    %c0_30 = arith.constant 0 : index
    %c0_31 = arith.constant 0 : index
    %48 = vector.load %arg12[%c0_30, %c0_31] : memref<32x32xf32, #tpu.memory_space<vmem>>, vector<32x32xf32>
    tpu.vector_store %arg12[%c0_30, %c0_31], %47 {strides = array<i32>} : memref<32x32xf32, #tpu.memory_space<vmem>>, vector<32x32xf32>,
    return
  }
  func.func @transform_0(%arg0: i32) -> (i32, i32) {
    %c0_i32 = arith.constant 0 : i32
    %c0_i32_0 = arith.constant 0 : i32
    return %arg0, %c0_i32 : i32, i32
  }
  func.func @transform_1(%arg0: i32) -> (i32, i32) {
    %c0_i32 = arith.constant 0 : i32
    %c0_i32_0 = arith.constant 0 : i32
    %c0_i32_1 = arith.constant 0 : i32
    return %c0_i32, %c0_i32_0 : i32, i32
  }
  func.func @transform_2(%arg0: i32) -> (i32, i32) {
    %c0_i32 = arith.constant 0 : i32
    %c0_i32_0 = arith.constant 0 : i32
    %c0_i32_1 = arith.constant 0 : i32
    return %c0_i32, %c0_i32_0 : i32, i32
  }
  func.func @transform_3(%arg0: i32) -> (i32, i32) {
    %c0_i32 = arith.constant 0 : i32
    %c0_i32_0 = arith.constant 0 : i32
    %c0_i32_1 = arith.constant 0 : i32
    return %c0_i32, %c0_i32_0 : i32, i32
  }
  func.func @transform_4(%arg0: i32) -> (i32, i32) {
    %c0_i32 = arith.constant 0 : i32
    %c0_i32_0 = arith.constant 0 : i32
    %c0_i32_1 = arith.constant 0 : i32
    return %c0_i32, %c0_i32_0 : i32, i32
  }
  func.func @transform_5(%arg0: i32) -> (i32, i32) {
    %c0_i32 = arith.constant 0 : i32
    %c0_i32_0 = arith.constant 0 : i32
    %c0_i32_1 = arith.constant 0 : i32
    return %c0_i32, %c0_i32_0 : i32, i32
  }
  func.func @transform_6(%arg0: i32) -> (i32, i32) {
    %c0_i32 = arith.constant 0 : i32
    %c0_i32_0 = arith.constant 0 : i32
    %c0_i32_1 = arith.constant 0 : i32
    return %c0_i32, %c0_i32_0 : i32, i32
  }
  func.func @transform_7(%arg0: i32) -> (i32, i32) {
    %c0_i32 = arith.constant 0 : i32
    %c0_i32_0 = arith.constant 0 : i32
    %c0_i32_1 = arith.constant 0 : i32
    return %c0_i32, %c0_i32_0 : i32, i32
  }
  func.func @transform_8(%arg0: i32) -> (i32, i32) {
    %c0_i32 = arith.constant 0 : i32
    %c0_i32_0 = arith.constant 0 : i32
    %c0_i32_1 = arith.constant 0 : i32
    return %c0_i32, %c0_i32_0 : i32, i32
  }
  func.func @transform_9(%arg0: i32) -> (i32, i32) {
    %c0_i32 = arith.constant 0 : i32
    %c0_i32_0 = arith.constant 0 : i32
    %c0_i32_1 = arith.constant 0 : i32
    return %c0_i32, %c0_i32_0 : i32, i32
  }
  func.func @transform_10(%arg0: i32) -> (i32, i32) {
    %c0_i32 = arith.constant 0 : i32
    %c0_i32_0 = arith.constant 0 : i32
    %c0_i32_1 = arith.constant 0 : i32
    return %c0_i32, %c0_i32_0 : i32, i32
  }
  func.func @transform_11(%arg0: i32) -> (i32, i32) {
    %c0_i32 = arith.constant 0 : i32
    %c0_i32_0 = arith.constant 0 : i32
    return %arg0, %c0_i32 : i32, i32
  }
}

</mosaic_0001>

<llo_original>
// kernel: tpu_custom_call.1
$region0: #{tpu_custom_call.1}
  #allocation0 [shape = 'u32[]', space=smem, size = 0x4, offset = 0x4, fixed_abs, tag = 'smem constant byte address 0x4 - core index']
  #allocation1 [shape = 'u32[144,128]{1,0:T(1,128)}', space=vmem, size = 0x12000, scoped, tag = 'internal scratch']
  %s0 = inlined_call_operand.vmem [shape: f32[32,12], index: 0, kind: input, shape index: {}]
  %s1 = inlined_call_operand.vmem [shape: f32[12,32], index: 1, kind: input, shape index: {}]
  %s2 = inlined_call_operand.vmem [shape: f32[1,32], index: 2, kind: input, shape index: {}]
  %s3 = inlined_call_operand.vmem [shape: f32[32,64], index: 3, kind: input, shape index: {}]
  %s4 = inlined_call_operand.vmem [shape: f32[1,64], index: 4, kind: input, shape index: {}]
  %s5 = inlined_call_operand.vmem [shape: f32[64,32], index: 5, kind: input, shape index: {}]
  %s6 = inlined_call_operand.vmem [shape: f32[1,32], index: 6, kind: input, shape index: {}]
  %s7 = inlined_call_operand.vmem [shape: f32[1,32], index: 7, kind: input, shape index: {}]
  %s8 = inlined_call_operand.vmem [shape: f32[1,32], index: 8, kind: input, shape index: {}]
  %s9 = inlined_call_operand.vmem [shape: f32[32,32], index: 9, kind: input, shape index: {}]
  %s10 = inlined_call_operand.vmem [shape: f32[1,32], index: 10, kind: input, shape index: {}]
  %s11 = inlined_call_operand.hbm [shape: f32[32,32], index: 11, kind: output, shape index: {}]
  %s12 = sld [smem:[#allocation0]]
  $region54: #{tpu_custom_call.1} parent=0
    _
  %s14 = ssub.s32 1, %s12
  %s15 = scalar_select 0, %s14, %s12
  $region1: #{tpu_custom_call.1} parent=0
    #allocation2 [shape = 'u8[16384]{0}', space=vmem, size = 0x4000, scoped, tag = 'output window, operand 0, single buffered']
    #allocation3 [shape = 's32[1]{0}', space=sflag, size = 0x4, scoped, tag = 'scoped memory for tpu_custom_call.1']
    %16 = vsyncpa [#allocation3], 0
    // Predicated region
    $region2: #{tpu_custom_call.1} parent=1 // pred_check
      _
    $region3: #{tpu_custom_call.1} parent=1 // pred_check_branch
      %18 = sbr.rel (0) target = $region5
    $region4: #{tpu_custom_call.1} parent=1 // pred_region
      _
    $region5: #{tpu_custom_call.1} parent=1 // pred_fallthru
      _
    // Predicated region
    $region6: #{tpu_custom_call.1} parent=1 // pred_check
      _
    $region7: #{tpu_custom_call.1} parent=1 // pred_check_branch
      %20 = sbr.rel (0) target = $region9
    $region8: #{tpu_custom_call.1} parent=1 // pred_region
      _
    $region9: #{tpu_custom_call.1} parent=1 // pred_fallthru
      _
    // Predicated region
    $region10: #{tpu_custom_call.1} parent=1 // pred_check
      _
    $region11: #{tpu_custom_call.1} parent=1 // pred_check_branch
      %22 = sbr.rel (0) target = $region13
    $region12: #{tpu_custom_call.1} parent=1 // pred_region
      _
    $region13: #{tpu_custom_call.1} parent=1 // pred_fallthru
      _
    // Predicated region
    $region14: #{tpu_custom_call.1} parent=1 // pred_check
      _
    $region15: #{tpu_custom_call.1} parent=1 // pred_check_branch
      %24 = sbr.rel (0) target = $region17
    $region16: #{tpu_custom_call.1} parent=1 // pred_region
      _
    $region17: #{tpu_custom_call.1} parent=1 // pred_fallthru
      _
    // Predicated region
    $region18: #{tpu_custom_call.1} parent=1 // pred_check
      _
    $region19: #{tpu_custom_call.1} parent=1 // pred_check_branch
      %26 = sbr.rel (0) target = $region21
    $region20: #{tpu_custom_call.1} parent=1 // pred_region
      _
    $region21: #{tpu_custom_call.1} parent=1 // pred_fallthru
      _
    // Predicated region
    $region22: #{tpu_custom_call.1} parent=1 // pred_check
      _
    $region23: #{tpu_custom_call.1} parent=1 // pred_check_branch
      %28 = sbr.rel (0) target = $region25
    $region24: #{tpu_custom_call.1} parent=1 // pred_region
      _
    $region25: #{tpu_custom_call.1} parent=1 // pred_fallthru
      _
    // Predicated region
    $region26: #{tpu_custom_call.1} parent=1 // pred_check
      _
    $region27: #{tpu_custom_call.1} parent=1 // pred_check_branch
      %30 = sbr.rel (0) target = $region29
    $region28: #{tpu_custom_call.1} parent=1 // pred_region
      _
    $region29: #{tpu_custom_call.1} parent=1 // pred_fallthru
      _
    // Predicated region
    $region30: #{tpu_custom_call.1} parent=1 // pred_check
      _
    $region31: #{tpu_custom_call.1} parent=1 // pred_check_branch
      %32 = sbr.rel (0) target = $region33
    $region32: #{tpu_custom_call.1} parent=1 // pred_region
      _
    $region33: #{tpu_custom_call.1} parent=1 // pred_fallthru
      _
    // Predicated region
    $region34: #{tpu_custom_call.1} parent=1 // pred_check
      _
    $region35: #{tpu_custom_call.1} parent=1 // pred_check_branch
      %34 = sbr.rel (0) target = $region37
    $region36: #{tpu_custom_call.1} parent=1 // pred_region
      _
    $region37: #{tpu_custom_call.1} parent=1 // pred_fallthru
      _
    // Predicated region
    $region38: #{tpu_custom_call.1} parent=1 // pred_check
      _
    $region39: #{tpu_custom_call.1} parent=1 // pred_check_branch
      %36 = sbr.rel (0) target = $region41
    $region40: #{tpu_custom_call.1} parent=1 // pred_region
      _
    $region41: #{tpu_custom_call.1} parent=1 // pred_fallthru
      _
    // Predicated region
    $region42: #{tpu_custom_call.1} parent=1 // pred_check
      _
    $region43: #{tpu_custom_call.1} parent=1 // pred_check_branch
      %38 = sbr.rel (0) target = $region45
    $region44: #{tpu_custom_call.1} parent=1 // pred_region
      _
    $region45: #{tpu_custom_call.1} parent=1 // pred_fallthru
      _
    %v39 = vld [vmem:[%s0] sm:$0xff]
    %v40 = vld [vmem:[%s0 + $0x8] sm:$0xff]
    %v41 = vld [vmem:[%s0 + $0x10] sm:$0xff]
    %v42 = vld [vmem:[%s0 + $0x18] sm:$0xff]
    %v43 = vld [vmem:[%s1] sm:$0xff]
    %v44 = vld [vmem:[%s1 + $0x8] sm:$0xf]
    %v45 = vld [vmem:[%s2] sm:$0x1]
    %v47 = vlaneseq
    %v48 = vshrl.u32 %v47, 7
    %v49 = vsub.s32 0, %v48
    %v50 = vrot.slane %v45, %v49
    %vm52 = vcmask 97280
    %v54 = vsel %vm52, %v39, 0
    %v57 = vsel %vm52, %v40, 0
    %v60 = vsel %vm52, %v41, 0
    %v63 = vsel %vm52, %v42, 0
    %vm65 = vcmask 1043456
    %v67 = vsel %vm65, %v44, 0
    %69 = vmatprep.subr.mxu0 0.0
    %70 = vmatpush1.msra.mxu0 %v43
    %71 = vmatprep.subr.mxu0 0.0
    %72 = vmatpush1.msra.mxu0 %v67
    %73 = vmatprep.subr.mxu0 0.0
    %74 = vmatpush1.msra.mxu0 0.0
    %75 = vmatprep.subr.mxu0 0.0
    %76 = vmatpush1.msra.mxu0 0.0
    %77 = vmatprep.subr.mxu0 0.0
    %78 = vmatpush1.msra.mxu0 0.0
    %79 = vmatprep.subr.mxu0 0.0
    %80 = vmatpush1.msra.mxu0 0.0
    %81 = vmatprep.subr.mxu0 0.0
    %82 = vmatpush1.msra.mxu0 0.0
    %83 = vmatprep.subr.mxu0 0.0
    %84 = vmatpush1.msra.mxu0 0.0
    %85 = vmatprep.subr.mxu0 0.0
    %86 = vmatpush1.msra.mxu0 0.0
    %87 = vmatprep.subr.mxu0 0.0
    %88 = vmatpush1.msra.mxu0 0.0
    %89 = vmatprep.subr.mxu0 0.0
    %90 = vmatpush1.msra.mxu0 0.0
    %91 = vmatprep.subr.mxu0 0.0
    %92 = vmatpush1.msra.mxu0 0.0
    %93 = vmatprep.subr.mxu0 0.0
    %94 = vmatpush1.msra.mxu0 0.0
    %95 = vmatprep.subr.mxu0 0.0
    %96 = vmatpush1.msra.mxu0 0.0
    %97 = vmatprep.subr.mxu0 0.0
    %98 = vmatpush1.msra.mxu0 0.0
    %99 = vmatprep.subr.mxu0 0.0
    %100 = vmatpush1.msra.mxu0 0.0
    %101 = vmatprep.subr.mxu0 0.0
    %102 = vmatpush1.msra.mxu0 0.0
    %103 = vmatprep.subr.mxu0 0.0
    %104 = vmatpush1.msra.mxu0 0.0
    %105 = vmatprep.subr.mxu0 0.0
    %106 = vmatpush1.msra.mxu0 0.0
    %107 = vmatprep.subr.mxu0 0.0
    %108 = vmatpush1.msra.mxu0 0.0
    %109 = vmatprep.subr.mxu0 0.0
    %110 = vmatpush1.msra.mxu0 0.0
    %111 = vmatprep.subr.mxu0 0.0
    %112 = vmatpush1.msra.mxu0 0.0
    %113 = vmatprep.subr.mxu0 0.0
    %114 = vmatpush1.msra.mxu0 0.0
    %115 = vmatprep.subr.mxu0 0.0
    %116 = vmatpush1.msra.mxu0 0.0
    %117 = vmatprep.subr.mxu0 0.0
    %118 = vmatpush1.msra.mxu0 0.0
    %119 = vmatprep.subr.mxu0 0.0
    %120 = vmatpush1.msra.mxu0 0.0
    %121 = vmatprep.subr.mxu0 0.0
    %122 = vmatpush1.msra.mxu0 0.0
    %123 = vmatprep.subr.mxu0 0.0
    %124 = vmatpush1.msra.mxu0 0.0
    %125 = vmatprep.subr.mxu0 0.0
    %126 = vmatpush1.msra.mxu0 0.0
    %127 = vmatprep.subr.mxu0 0.0
    %128 = vmatpush1.msra.mxu0 0.0
    %129 = vmatprep.subr.mxu0 0.0
    %130 = vmatpush1.msra.mxu0 0.0
    %131 = vmatprep.subr.mxu0 0.0
    %132 = vmatpush1.msra.mxu0 0.0
    %133 = vmatprep.mubr.f32.mxu0 0.0
    %134 = vmatmul.mubr.f32.gmra.mrb[0].mxu0 %v54
    %v135 = vpop.f32.mrb[0].mxu0
    %v136 = vadd.f32 %v50, %v135
    %v137 = vpop.f32.mrb[0].mxu0
    %138 = vmatprep.mubr.f32.mxu0 0.0
    %139 = vmatmul.mubr.f32.gmra.mrb[0].mxu0 %v57
    %v140 = vpop.f32.mrb[0].mxu0
    %v141 = vadd.f32 %v50, %v140
    %v142 = vpop.f32.mrb[0].mxu0
    %143 = vmatprep.mubr.f32.mxu0 0.0
    %144 = vmatmul.mubr.f32.gmra.mrb[0].mxu0 %v60
    %v145 = vpop.f32.mrb[0].mxu0
    %v146 = vadd.f32 %v50, %v145
    %v147 = vpop.f32.mrb[0].mxu0
    %148 = vmatprep.mubr.f32.mxu0 0.0
    %149 = vmatmul.mubr.f32.gmra.mrb[0].mxu0 %v63
    %v150 = vpop.f32.mrb[0].mxu0
    %v151 = vadd.f32 %v50, %v150
    %v152 = vpop.f32.mrb[0].mxu0
    %153 = vdwg.mxu0
    %v154 = vld [vmem:[%s3] sm:$0xff]
    %v155 = vld [vmem:[%s3 + $0x8] sm:$0xff]
    %v156 = vld [vmem:[%s3 + $0x10] sm:$0xff]
    %v157 = vld [vmem:[%s3 + $0x18] sm:$0xff]
    %v158 = vld [vmem:[%s4] sm:$0x1]
    %v160 = vlaneseq
    %v161 = vshrl.u32 %v160, 7
    %v162 = vsub.s32 0, %v161
    %v163 = vrot.slane %v158, %v162
    %vm165 = vcmask 261120
    %v167 = vsel %vm165, %v136, 0
    %v170 = vsel %vm165, %v141, 0
    %v173 = vsel %vm165, %v146, 0
    %v176 = vsel %vm165, %v151, 0
    %178 = vmatprep.subr.mxu0 0.0
    %179 = vmatpush1.msra.mxu0 %v154
    %180 = vmatprep.subr.mxu0 0.0
    %181 = vmatpush1.msra.mxu0 %v155
    %182 = vmatprep.subr.mxu0 0.0
    %183 = vmatpush1.msra.mxu0 %v156
    %184 = vmatprep.subr.mxu0 0.0
    %185 = vmatpush1.msra.mxu0 %v157
    %186 = vmatprep.subr.mxu0 0.0
    %187 = vmatpush1.msra.mxu0 0.0
    %188 = vmatprep.subr.mxu0 0.0
    %189 = vmatpush1.msra.mxu0 0.0
    %190 = vmatprep.subr.mxu0 0.0
    %191 = vmatpush1.msra.mxu0 0.0
    %192 = vmatprep.subr.mxu0 0.0
    %193 = vmatpush1.msra.mxu0 0.0
    %194 = vmatprep.subr.mxu0 0.0
    %195 = vmatpush1.msra.mxu0 0.0
    %196 = vmatprep.subr.mxu0 0.0
    %197 = vmatpush1.msra.mxu0 0.0
    %198 = vmatprep.subr.mxu0 0.0
    %199 = vmatpush1.msra.mxu0 0.0
    %200 = vmatprep.subr.mxu0 0.0
    %201 = vmatpush1.msra.mxu0 0.0
    %202 = vmatprep.subr.mxu0 0.0
    %203 = vmatpush1.msra.mxu0 0.0
    %204 = vmatprep.subr.mxu0 0.0
    %205 = vmatpush1.msra.mxu0 0.0
    %206 = vmatprep.subr.mxu0 0.0
    %207 = vmatpush1.msra.mxu0 0.0
    %208 = vmatprep.subr.mxu0 0.0
    %209 = vmatpush1.msra.mxu0 0.0
    %210 = vmatprep.subr.mxu0 0.0
    %211 = vmatpush1.msra.mxu0 0.0
    %212 = vmatprep.subr.mxu0 0.0
    %213 = vmatpush1.msra.mxu0 0.0
    %214 = vmatprep.subr.mxu0 0.0
    %215 = vmatpush1.msra.mxu0 0.0
    %216 = vmatprep.subr.mxu0 0.0
    %217 = vmatpush1.msra.mxu0 0.0
    %218 = vmatprep.subr.mxu0 0.0
    %219 = vmatpush1.msra.mxu0 0.0
    %220 = vmatprep.subr.mxu0 0.0
    %221 = vmatpush1.msra.mxu0 0.0
    %222 = vmatprep.subr.mxu0 0.0
    %223 = vmatpush1.msra.mxu0 0.0
    %224 = vmatprep.subr.mxu0 0.0
    %225 = vmatpush1.msra.mxu0 0.0
    %226 = vmatprep.subr.mxu0 0.0
    %227 = vmatpush1.msra.mxu0 0.0
    %228 = vmatprep.subr.mxu0 0.0
    %229 = vmatpush1.msra.mxu0 0.0
    %230 = vmatprep.subr.mxu0 0.0
    %231 = vmatpush1.msra.mxu0 0.0
    %232 = vmatprep.subr.mxu0 0.0
    %233 = vmatpush1.msra.mxu0 0.0
    %234 = vmatprep.subr.mxu0 0.0
    %235 = vmatpush1.msra.mxu0 0.0
    %236 = vmatprep.subr.mxu0 0.0
    %237 = vmatpush1.msra.mxu0 0.0
    %238 = vmatprep.subr.mxu0 0.0
    %239 = vmatpush1.msra.mxu0 0.0
    %240 = vmatprep.subr.mxu0 0.0
    %241 = vmatpush1.msra.mxu0 0.0
    %242 = vmatprep.mubr.f32.mxu0 0.0
    %243 = vmatmul.mubr.f32.gmra.mrb[0].mxu0 %v167
    %v244 = vpop.f32.mrb[0].mxu0
    %v245 = vadd.f32 %v163, %v244
    %v246 = vpop.f32.mrb[0].mxu0
    %247 = vmatprep.mubr.f32.mxu0 0.0
    %248 = vmatmul.mubr.f32.gmra.mrb[0].mxu0 %v170
    %v249 = vpop.f32.mrb[0].mxu0
    %v250 = vadd.f32 %v163, %v249
    %v251 = vpop.f32.mrb[0].mxu0
    %252 = vmatprep.mubr.f32.mxu0 0.0
    %253 = vmatmul.mubr.f32.gmra.mrb[0].mxu0 %v173
    %v254 = vpop.f32.mrb[0].mxu0
    %v255 = vadd.f32 %v163, %v254
    %v256 = vpop.f32.mrb[0].mxu0
    %257 = vmatprep.mubr.f32.mxu0 0.0
    %258 = vmatmul.mubr.f32.gmra.mrb[0].mxu0 %v176
    %v259 = vpop.f32.mrb[0].mxu0
    %v260 = vadd.f32 %v163, %v259
    %v261 = vpop.f32.mrb[0].mxu0
    %262 = vdwg.mxu0
    %v263 = vmax.f32 %v245, 0.0
    %v264 = vmax.f32 %v250, 0.0
    %v265 = vmax.f32 %v255, 0.0
    %v266 = vmax.f32 %v260, 0.0
    %v267 = vld [vmem:[%s5] sm:$0xff]
    %v268 = vld [vmem:[%s5 + $0x8] sm:$0xff]
    %v269 = vld [vmem:[%s5 + $0x10] sm:$0xff]
    %v270 = vld [vmem:[%s5 + $0x18] sm:$0xff]
    %v271 = vld [vmem:[%s5 + $0x20] sm:$0xff]
    %v272 = vld [vmem:[%s5 + $0x28] sm:$0xff]
    %v273 = vld [vmem:[%s5 + $0x30] sm:$0xff]
    %v274 = vld [vmem:[%s5 + $0x38] sm:$0xff]
    %vm275 = vcmask 523264
    %v277 = vsel %vm275, %v263, 0
    %v280 = vsel %vm275, %v264, 0
    %v283 = vsel %vm275, %v265, 0
    %v286 = vsel %vm275, %v266, 0
    %288 = vmatprep.subr.mxu0 0.0
    %289 = vmatpush1.msra.mxu0 %v267
    %290 = vmatprep.subr.mxu0 0.0
    %291 = vmatpush1.msra.mxu0 %v268
    %292 = vmatprep.subr.mxu0 0.0
    %293 = vmatpush1.msra.mxu0 %v269
    %294 = vmatprep.subr.mxu0 0.0
    %295 = vmatpush1.msra.mxu0 %v270
    %296 = vmatprep.subr.mxu0 0.0
    %297 = vmatpush1.msra.mxu0 %v271
    %298 = vmatprep.subr.mxu0 0.0
    %299 = vmatpush1.msra.mxu0 %v272
    %300 = vmatprep.subr.mxu0 0.0
    %301 = vmatpush1.msra.mxu0 %v273
    %302 = vmatprep.subr.mxu0 0.0
    %303 = vmatpush1.msra.mxu0 %v274
    %304 = vmatprep.subr.mxu0 0.0
    %305 = vmatpush1.msra.mxu0 0.0
    %306 = vmatprep.subr.mxu0 0.0
    %307 = vmatpush1.msra.mxu0 0.0
    %308 = vmatprep.subr.mxu0 0.0
    %309 = vmatpush1.msra.mxu0 0.0
    %310 = vmatprep.subr.mxu0 0.0
    %311 = vmatpush1.msra.mxu0 0.0
    %312 = vmatprep.subr.mxu0 0.0
    %313 = vmatpush1.msra.mxu0 0.0
    %314 = vmatprep.subr.mxu0 0.0
    %315 = vmatpush1.msra.mxu0 0.0
    %316 = vmatprep.subr.mxu0 0.0
    %317 = vmatpush1.msra.mxu0 0.0
    %318 = vmatprep.subr.mxu0 0.0
    %319 = vmatpush1.msra.mxu0 0.0
    %320 = vmatprep.subr.mxu0 0.0
    %321 = vmatpush1.msra.mxu0 0.0
    %322 = vmatprep.subr.mxu0 0.0
    %323 = vmatpush1.msra.mxu0 0.0
    %324 = vmatprep.subr.mxu0 0.0
    %325 = vmatpush1.msra.mxu0 0.0
    %326 = vmatprep.subr.mxu0 0.0
    %327 = vmatpush1.msra.mxu0 0.0
    %328 = vmatprep.subr.mxu0 0.0
    %329 = vmatpush1.msra.mxu0 0.0
    %330 = vmatprep.subr.mxu0 0.0
    %331 = vmatpush1.msra.mxu0 0.0
    %332 = vmatprep.subr.mxu0 0.0
    %333 = vmatpush1.msra.mxu0 0.0
    %334 = vmatprep.subr.mxu0 0.0
    %335 = vmatpush1.msra.mxu0 0.0
    %336 = vmatprep.subr.mxu0 0.0
    %337 = vmatpush1.msra.mxu0 0.0
    %338 = vmatprep.subr.mxu0 0.0
    %339 = vmatpush1.msra.mxu0 0.0
    %340 = vmatprep.subr.mxu0 0.0
    %341 = vmatpush1.msra.mxu0 0.0
    %342 = vmatprep.subr.mxu0 0.0
    %343 = vmatpush1.msra.mxu0 0.0
    %344 = vmatprep.subr.mxu0 0.0
    %345 = vmatpush1.msra.mxu0 0.0
    %346 = vmatprep.subr.mxu0 0.0
    %347 = vmatpush1.msra.mxu0 0.0
    %348 = vmatprep.subr.mxu0 0.0
    %349 = vmatpush1.msra.mxu0 0.0
    %350 = vmatprep.subr.mxu0 0.0
    %351 = vmatpush1.msra.mxu0 0.0
    %352 = vmatprep.mubr.f32.mxu0 0.0
    %353 = vmatmul.mubr.f32.gmra.mrb[0].mxu0 %v277
    %v354 = vpop.f32.mrb[0].mxu0
    %v355 = vadd.f32 0.0, %v354
    %v356 = vpop.f32.mrb[0].mxu0
    %357 = vmatprep.mubr.f32.mxu0 0.0
    %358 = vmatmul.mubr.f32.gmra.mrb[0].mxu0 %v280
    %v359 = vpop.f32.mrb[0].mxu0
    %v360 = vadd.f32 0.0, %v359
    %v361 = vpop.f32.mrb[0].mxu0
    %362 = vmatprep.mubr.f32.mxu0 0.0
    %363 = vmatmul.mubr.f32.gmra.mrb[0].mxu0 %v283
    %v364 = vpop.f32.mrb[0].mxu0
    %v365 = vadd.f32 0.0, %v364
    %v366 = vpop.f32.mrb[0].mxu0
    %367 = vmatprep.mubr.f32.mxu0 0.0
    %368 = vmatmul.mubr.f32.gmra.mrb[0].mxu0 %v286
    %v369 = vpop.f32.mrb[0].mxu0
    %v370 = vadd.f32 0.0, %v369
    %v371 = vpop.f32.mrb[0].mxu0
    %372 = vdwg.mxu0
    %v373 = vadd.f32 %v136, %v355
    %v374 = vadd.f32 %v141, %v360
    %v375 = vadd.f32 %v146, %v365
    %v376 = vadd.f32 %v151, %v370
    %v377 = vld [vmem:[%s6] sm:$0x1]
    %v379 = vlaneseq
    %v380 = vshrl.u32 %v379, 7
    %v381 = vsub.s32 0, %v380
    %v382 = vrot.slane %v377, %v381
    %v384 = vadd.f32 %v373, %v382
    %v385 = vadd.f32 %v374, %v382
    %v386 = vadd.f32 %v375, %v382
    %v387 = vadd.f32 %v376, %v382
    %v388 = vld [vmem:[%s7] sm:$0x1]
    %v389 = vld [vmem:[%s8] sm:$0x1]
    %v390 = vsel %vm165, %v384, 0.0
    %391 = vadd.xlane.f32.xlu0 %v390
    %v392 = vpop.xlane.xlu0 %391
    %v393 = vsel %vm165, %v385, 0.0
    %394 = vadd.xlane.f32.xlu0 %v393
    %v395 = vpop.xlane.xlu0 %394
    %v396 = vsel %vm165, %v386, 0.0
    %397 = vadd.xlane.f32.xlu0 %v396
    %v398 = vpop.xlane.xlu0 %397
    %v399 = vsel %vm165, %v387, 0.0
    %400 = vadd.xlane.f32.xlu0 %v399
    %v401 = vpop.xlane.xlu0 %400
    %v402 = vrcp.pop 32.0
    %v403 = vmul.f32 %v392, %v402
    %v404 = vmul.f32 %v395, %v402
    %v405 = vmul.f32 %v398, %v402
    %v406 = vmul.f32 %v401, %v402
    %v407 = vsub.f32 %v384, %v403
    %v408 = vsub.f32 %v385, %v404
    %v409 = vsub.f32 %v386, %v405
    %v410 = vsub.f32 %v387, %v406
    %v411 = vmul.f32 %v407, %v407
    %v412 = vmul.f32 %v408, %v408
    %v413 = vmul.f32 %v409, %v409
    %v414 = vmul.f32 %v410, %v410
    %v415 = vsel %vm165, %v411, 0.0
    %416 = vadd.xlane.f32.xlu0 %v415
    %v417 = vpop.xlane.xlu0 %416
    %v418 = vsel %vm165, %v412, 0.0
    %419 = vadd.xlane.f32.xlu0 %v418
    %v420 = vpop.xlane.xlu0 %419
    %v421 = vsel %vm165, %v413, 0.0
    %422 = vadd.xlane.f32.xlu0 %v421
    %v423 = vpop.xlane.xlu0 %422
    %v424 = vsel %vm165, %v414, 0.0
    %425 = vadd.xlane.f32.xlu0 %v424
    %v426 = vpop.xlane.xlu0 %425
    %v427 = vmul.f32 %v417, %v402
    %v428 = vmul.f32 %v420, %v402
    %v429 = vmul.f32 %v423, %v402
    %v430 = vmul.f32 %v426, %v402
    %v431 = vadd.f32 %v427, 1e-05
    %v432 = vadd.f32 %v428, 1e-05
    %v433 = vadd.f32 %v429, 1e-05
    %v434 = vadd.f32 %v430, 1e-05
    %v435 = vrsqrt.pop %v431
    %v436 = vrsqrt.pop %v432
    %v437 = vrsqrt.pop %v433
    %v438 = vrsqrt.pop %v434
    %v439 = vmul.f32 %v407, %v435
    %v440 = vmul.f32 %v408, %v436
    %v441 = vmul.f32 %v409, %v437
    %v442 = vmul.f32 %v410, %v438
    %v444 = vlaneseq
    %v445 = vshrl.u32 %v444, 7
    %v446 = vsub.s32 0, %v445
    %v447 = vrot.slane %v388, %v446
    %v449 = vmul.f32 %v439, %v447
    %v450 = vmul.f32 %v440, %v447
    %v451 = vmul.f32 %v441, %v447
    %v452 = vmul.f32 %v442, %v447
    %v454 = vlaneseq
    %v455 = vshrl.u32 %v454, 7
    %v456 = vsub.s32 0, %v455
    %v457 = vrot.slane %v389, %v456
    %v459 = vadd.f32 %v449, %v457
    %v460 = vadd.f32 %v450, %v457
    %v461 = vadd.f32 %v451, %v457
    %v462 = vadd.f32 %v452, %v457
    %v463 = vld [vmem:[%s9] sm:$0xff]
    %v464 = vld [vmem:[%s9 + $0x8] sm:$0xff]
    %v465 = vld [vmem:[%s9 + $0x10] sm:$0xff]
    %v466 = vld [vmem:[%s9 + $0x18] sm:$0xff]
    %v467 = vld [vmem:[%s10] sm:$0x1]
    %v469 = vlaneseq
    %v470 = vshrl.u32 %v469, 7
    %v471 = vsub.s32 0, %v470
    %v472 = vrot.slane %v467, %v471
    %v475 = vsel %vm165, %v459, 0
    %v478 = vsel %vm165, %v460, 0
    %v481 = vsel %vm165, %v461, 0
    %v484 = vsel %vm165, %v462, 0
    %486 = vmatprep.subr.mxu0 0.0
    %487 = vmatpush1.msra.mxu0 %v463
    %488 = vmatprep.subr.mxu0 0.0
    %489 = vmatpush1.msra.mxu0 %v464
    %490 = vmatprep.subr.mxu0 0.0
    %491 = vmatpush1.msra.mxu0 %v465
    %492 = vmatprep.subr.mxu0 0.0
    %493 = vmatpush1.msra.mxu0 %v466
    %494 = vmatprep.subr.mxu0 0.0
    %495 = vmatpush1.msra.mxu0 0.0
    %496 = vmatprep.subr.mxu0 0.0
    %497 = vmatpush1.msra.mxu0 0.0
    %498 = vmatprep.subr.mxu0 0.0
    %499 = vmatpush1.msra.mxu0 0.0
    %500 = vmatprep.subr.mxu0 0.0
    %501 = vmatpush1.msra.mxu0 0.0
    %502 = vmatprep.subr.mxu0 0.0
    %503 = vmatpush1.msra.mxu0 0.0
    %504 = vmatprep.subr.mxu0 0.0
    %505 = vmatpush1.msra.mxu0 0.0
    %506 = vmatprep.subr.mxu0 0.0
    %507 = vmatpush1.msra.mxu0 0.0
    %508 = vmatprep.subr.mxu0 0.0
    %509 = vmatpush1.msra.mxu0 0.0
    %510 = vmatprep.subr.mxu0 0.0
    %511 = vmatpush1.msra.mxu0 0.0
    %512 = vmatprep.subr.mxu0 0.0
    %513 = vmatpush1.msra.mxu0 0.0
    %514 = vmatprep.subr.mxu0 0.0
    %515 = vmatpush1.msra.mxu0 0.0
    %516 = vmatprep.subr.mxu0 0.0
    %517 = vmatpush1.msra.mxu0 0.0
    %518 = vmatprep.subr.mxu0 0.0
    %519 = vmatpush1.msra.mxu0 0.0
    %520 = vmatprep.subr.mxu0 0.0
    %521 = vmatpush1.msra.mxu0 0.0
    %522 = vmatprep.subr.mxu0 0.0
    %523 = vmatpush1.msra.mxu0 0.0
    %524 = vmatprep.subr.mxu0 0.0
    %525 = vmatpush1.msra.mxu0 0.0
    %526 = vmatprep.subr.mxu0 0.0
    %527 = vmatpush1.msra.mxu0 0.0
    %528 = vmatprep.subr.mxu0 0.0
    %529 = vmatpush1.msra.mxu0 0.0
    %530 = vmatprep.subr.mxu0 0.0
    %531 = vmatpush1.msra.mxu0 0.0
    %532 = vmatprep.subr.mxu0 0.0
    %533 = vmatpush1.msra.mxu0 0.0
    %534 = vmatprep.subr.mxu0 0.0
    %535 = vmatpush1.msra.mxu0 0.0
    %536 = vmatprep.subr.mxu0 0.0
    %537 = vmatpush1.msra.mxu0 0.0
    %538 = vmatprep.subr.mxu0 0.0
    %539 = vmatpush1.msra.mxu0 0.0
    %540 = vmatprep.subr.mxu0 0.0
    %541 = vmatpush1.msra.mxu0 0.0
    %542 = vmatprep.subr.mxu0 0.0
    %543 = vmatpush1.msra.mxu0 0.0
    %544 = vmatprep.subr.mxu0 0.0
    %545 = vmatpush1.msra.mxu0 0.0
    %546 = vmatprep.subr.mxu0 0.0
    %547 = vmatpush1.msra.mxu0 0.0
    %548 = vmatprep.subr.mxu0 0.0
    %549 = vmatpush1.msra.mxu0 0.0
    %550 = vmatprep.mubr.f32.mxu0 0.0
    %551 = vmatmul.mubr.f32.gmra.mrb[0].mxu0 %v475
    %v552 = vpop.f32.mrb[0].mxu0
    %v553 = vadd.f32 %v472, %v552
    %v554 = vpop.f32.mrb[0].mxu0
    %555 = vmatprep.mubr.f32.mxu0 0.0
    %556 = vmatmul.mubr.f32.gmra.mrb[0].mxu0 %v478
    %v557 = vpop.f32.mrb[0].mxu0
    %v558 = vadd.f32 %v472, %v557
    %v559 = vpop.f32.mrb[0].mxu0
    %560 = vmatprep.mubr.f32.mxu0 0.0
    %561 = vmatmul.mubr.f32.gmra.mrb[0].mxu0 %v481
    %v562 = vpop.f32.mrb[0].mxu0
    %v563 = vadd.f32 %v472, %v562
    %v564 = vpop.f32.mrb[0].mxu0
    %565 = vmatprep.mubr.f32.mxu0 0.0
    %566 = vmatmul.mubr.f32.gmra.mrb[0].mxu0 %v484
    %v567 = vpop.f32.mrb[0].mxu0
    %v568 = vadd.f32 %v472, %v567
    %v569 = vpop.f32.mrb[0].mxu0
    %570 = vdwg.mxu0
    %571 = vst.msk [vmem:[#allocation2] sm:$0xff] %vm165, %v553
    %572 = vst.msk [vmem:[#allocation2 + $0x8] sm:$0xff] %vm165, %v558
    %573 = vst.msk [vmem:[#allocation2 + $0x10] sm:$0xff] %vm165, %v563
    %574 = vst.msk [vmem:[#allocation2 + $0x18] sm:$0xff] %vm165, %v568
    // Predicated region
    $region46: #{tpu_custom_call.1} parent=1 // pred_check
      _
    $region47: #{tpu_custom_call.1} parent=1 // pred_check_branch
      %576 = sbr.rel (0) target = $region49
    $region48: #{tpu_custom_call.1} parent=1 // pred_region
      %s578 = ssub.s32 512, 512
      %579 = vsyncadd [#allocation3], %s578
      %s580 = sshll.u32 [#allocation2], 4
      %s581 = int_to_ptr.vmem [resolvable:$true] %s580
      %586 = dma.vmem_to_hbm [thread:$0]  %s581, 512, %s11, [#allocation3], 128, 128, 8
    $region49: #{tpu_custom_call.1} parent=1 // pred_fallthru
      _
    // Predicated region
    $region50: #{tpu_custom_call.1} parent=1 // pred_check
      _
    $region51: #{tpu_custom_call.1} parent=1 // pred_check_branch
      %588 = sbr.rel (0) target = $region53
    $region52: #{tpu_custom_call.1} parent=1 // pred_region
      %589 = dma.done [#allocation3], 512
    $region53: #{tpu_custom_call.1} parent=1 // pred_fallthru
      _
    %590 = vsyncpa [#allocation3], 1

</llo_original>
